<compile_context>
chip_gen: v7x
topology: tpu7x:2x2x1
jax: 0.10.0
libtpu: 0.0.40
codegen_flags: <defaults>
</compile_context>

<pallas_src>
import functools

import jax
import jax.numpy as jnp
from jax.experimental import pallas as pl
from jax.experimental.pallas import tpu as pltpu


def _fold_lanes_to_128(x):
    """Reduce the lane dim of x (rows, 128 * 2**m) down to (rows, 128).

    Pure halving folds at 128-aligned lane offsets: vreg-aligned slices + VPU
    adds, no cross-lane (XLU) work and no layout change.  The final 128 -> 1
    reduction is deferred to the JAX epilogue (done once, not per step).
    """
    w = x.shape[-1]
    while w > 128:
        w //= 2
        x = x[:, :w] + x[:, w:]
    return x


def _dice_partial_kernel(pred_ref, target_ref, numer_ref, denom_ref, *,
                         s_valid, ts, n_k_ps, needs_mask):
    """One grid step: accumulate sum(p*t) and sum(p*p + t*t) per row.

    pred_ref / target_ref : (N, ts) VMEM tiles, native dtype.
    numer_ref / denom_ref : (1, N, 128) f32 output blocks, resident across the
                            spatial (reduction) grid axis for the current split.
    """
    split = pl.program_id(0)
    k = pl.program_id(1)
    chunk = split * n_k_ps + k          # global spatial chunk index (unclamped)

    # Zero the resident accumulators at the start of each split's reduction.
    @pl.when(k == 0)
    def _init():
        numer_ref[...] = jnp.zeros_like(numer_ref)
        denom_ref[...] = jnp.zeros_like(denom_ref)

    # Cast the streamed tile (bf16/f16/f32/...) to f32 for accumulation.
    p = pred_ref[...].astype(jnp.float32)     # (N, ts)
    t = target_ref[...].astype(jnp.float32)   # (N, ts)

    def _accumulate(pp, tt):
        # 3 VPU multiplies + 1 add per element, then aligned halving folds to a
        # lane-dense (N, 128) partial; accumulate into the resident block.
        numer_ref[...] += _fold_lanes_to_128(pp * tt)[None]
        denom_ref[...] += _fold_lanes_to_128(pp * pp + tt * tt)[None]

    if needs_mask:
        # Only the (at most one per split) partial / padded chunk pays for the
        # iota + compare + selects; full chunks take the unmasked fast path.
        is_full = (chunk + 1) * ts <= s_valid

        @pl.when(is_full)
        def _fast():
            _accumulate(p, t)

        @pl.when(jnp.logical_not(is_full))
        def _masked():
            # OOB lanes of a partial block are unspecified -> mask BOTH inputs;
            # zeros are neutral for every partial sum.
            lane = jax.lax.broadcasted_iota(jnp.int32, p.shape, 1)
            valid = (chunk * ts + lane) < s_valid
            _accumulate(jnp.where(valid, p, 0.0), jnp.where(valid, t, 0.0))
    else:
        _accumulate(p, t)


def _pick_tile_s(s_pad, n_rows, itemsize, budget_bytes):
    """Largest lane tile of the form 128 * 2**m that fits the VMEM budget.

    Budget accounts for physical sublane padding of the row dim.  Power-of-two
    tiles keep the in-kernel lane folding exact halvings.
    """
    sublane = max(8, 32 // max(1, itemsize))        # f32: 8, bf16: 16, int8: 32
    rows_pad = -(-n_rows // sublane) * sublane
    ts = 128
    while ts * 2 * rows_pad * itemsize <= budget_bytes:
        ts *= 2
    # Never exceed the (padded) spatial extent.
    cap = 128
    while cap * 2 <= s_pad:
        cap *= 2
    return int(min(ts, cap))


def dice_loss(pred, target, *, tile_s=None, vmem_block_budget_bytes=6 << 20,
              buffer_count=None):
    """Pallas implementation of DiceLoss.forward(pred, target) (NC[D]HW inputs)."""
    assert pred.shape == target.shape, "pred/target must have matching shapes"
    assert pred.ndim >= 3, "expected (B, C, *spatial) inputs"
    B, C = int(pred.shape[0]), int(pred.shape[1])
    S = 1
    for d in pred.shape[2:]:
        S *= int(d)
    N = B * C

    # Sublanes carry the (batch*class) rows, lanes carry the flattened spatial
    # axis; inputs stay in their native dtype (no f32 upcast in HBM).
    p = pred.reshape(N, S)
    t = target.reshape(N, S)

    if S < 128:
        # Tiny spatial extent: zero-pad lanes to one full vreg row.  Zeros are
        # neutral for every partial sum, so no in-kernel masking is needed.
        p = jnp.pad(p, ((0, 0), (0, 128 - S)))
        t = jnp.pad(t, ((0, 0), (0, 128 - S)))
        s_pad = 128
        s_valid = 128
    else:
        s_pad = S
        s_valid = S

    itemsize = max(jnp.dtype(pred.dtype).itemsize, jnp.dtype(target.dtype).itemsize)
    if tile_s is None:
        tile_s = _pick_tile_s(s_pad, N, itemsize, vmem_block_budget_bytes)
    else:
        q = tile_s // 128
        assert tile_s >= 128 and tile_s % 128 == 0 and (q & (q - 1)) == 0, \
            "tile_s must be 128 * 2**m"
        while tile_s > 128 and tile_s > s_pad:
            tile_s //= 2

    n_k = pl.cdiv(s_pad, tile_s)
    # Split the spatial reduction into 2 halves on a leading "parallel" axis so
    # v7x's second TensorCore gets work even for tiny B*C; a loop on v5e/v6e.
    n_split = 2 if n_k >= 2 else 1
    n_k_ps = pl.cdiv(n_k, n_split)
    needs_mask = (n_split * n_k_ps * tile_s) > s_valid

    def in_index_map(s, k):
        # Clamp the (possibly) padded trailing chunk of the last split to a
        # valid block; the kernel masks its contribution to zero.
        chunk = jnp.minimum(s * n_k_ps + k, n_k - 1)
        return (0, chunk)

    in_spec_kwargs = {}
    if buffer_count is not None:        # optional deeper pipelining (v7x sweep)
        in_spec_kwargs["pipeline_mode"] = pl.Buffered(buffer_count)
    in_spec = pl.BlockSpec((N, tile_s), in_index_map, **in_spec_kwargs)
    out_spec = pl.BlockSpec((1, N, 128), lambda s, k: (s, 0, 0))
    out_sds = jax.ShapeDtypeStruct((n_split, N, 128), jnp.float32)

    sublane = max(8, 32 // max(1, itemsize))
    rows_pad = -(-N // sublane) * sublane
    block_bytes = rows_pad * tile_s * itemsize
    # 2 inputs x 2 pipeline buffers + small outputs + margin; capped so the
    # same limit is valid on v7x's 64 MiB VMEM.
    vmem_limit = int(min(64 << 20, max(32 << 20, 4 * block_bytes + (8 << 20))))

    kernel = functools.partial(_dice_partial_kernel, s_valid=s_valid, ts=tile_s,
                               n_k_ps=n_k_ps, needs_mask=needs_mask)

    numer_p, denom_p = pl.pallas_call(
        kernel,
        out_shape=(out_sds, out_sds),
        grid=(n_split, n_k_ps),
        in_specs=[in_spec, in_spec],
        out_specs=(out_spec, out_spec),
        compiler_params=pltpu.CompilerParams(
            dimension_semantics=("parallel", "arbitrary"),
            vmem_limit_bytes=vmem_limit),
    )(p, t)

    # Tiny epilogue in plain JAX: finish the 128-lane reduce + split sum, then
    # the exact DiceLoss formula (smooth=1 in the denominator only, matching
    # the PyTorch module).
    numer = jnp.sum(numer_p, axis=(0, 2)).reshape(B, C)
    denom = jnp.sum(denom_p, axis=(0, 2)).reshape(B, C)
    smooth = 1.0
    dice = jnp.sum(2.0 * numer / (denom + smooth), axis=1) / C
    return jnp.clip(jnp.mean(1.0 - dice), 0.0, 1.0)


if __name__ == "__main__":
    def reference(pr, tg):
        pr32 = pr.astype(jnp.float32)
        tg32 = tg.astype(jnp.float32)
        inter = jnp.sum(pr32 * tg32, axis=(2, 3, 4))
        p_sq = jnp.sum(pr32 * pr32, axis=(2, 3, 4))
        t_sq = jnp.sum(tg32 * tg32, axis=(2, 3, 4))
        dice = jnp.sum(2.0 * inter / (p_sq + t_sq + 1.0), axis=1) / pr.shape[1]
        return jnp.clip(jnp.mean(1.0 - dice), 0.0, 1.0)

    def make_inputs(seed, shape, dtype=jnp.float32):
        k1, k2 = jax.random.split(jax.random.PRNGKey(seed))
        pr = jax.nn.sigmoid(jax.random.normal(k1, shape, jnp.float32)).astype(dtype)
        tg = (jax.random.uniform(k2, shape) > 0.5).astype(dtype)
        return pr, tg

    # 1) S = 4*6*10 = 240 (not a multiple of 128): auto tile -> 128, n_k=2,
    #    2-way reduction split, masked tail chunk.
    pred, target = make_inputs(0, (2, 4, 4, 6, 10))
    ref = reference(pred, target)
    loss = jax.block_until_ready(dice_loss(pred, target))
    assert abs(float(loss) - float(ref)) < 1e-5, (float(loss), float(ref))

    # 2) S = 4*8*12 = 384, tile_s=128 -> n_k=3 (odd): exercises the clamped,
    #    fully-masked pad chunk on the second split.
    pred2, target2 = make_inputs(1, (2, 4, 4, 8, 12))
    ref2 = reference(pred2, target2)
    loss2 = jax.block_until_ready(dice_loss(pred2, target2, tile_s=128))
    assert abs(float(loss2) - float(ref2)) < 1e-5, (float(loss2), float(ref2))

    # 3) B=1, C=3 (N=3 < 8 sublanes), S = 4*8*16 = 512, tile_s=128 -> n_k=4,
    #    two accumulation steps per split, no masking.
    pred3, target3 = make_inputs(2, (1, 3, 4, 8, 16))
    ref3 = reference(pred3, target3)
    loss3 = jax.block_until_ready(dice_loss(pred3, target3, tile_s=128))
    assert abs(float(loss3) - float(ref3)) < 1e-5, (float(loss3), float(ref3))

    # 4) Same inputs, tile_s=512: exercises the in-kernel lane fold (512->128).
    loss4 = jax.block_until_ready(dice_loss(pred3, target3, tile_s=512))
    assert abs(float(loss4) - float(ref3)) < 1e-5, (float(loss4), float(ref3))

    # 5) S = 5*8*16 = 640, tile_s=512: fold + masked partial tail chunk + split.
    pred5, target5 = make_inputs(3, (2, 4, 5, 8, 16))
    ref5 = reference(pred5, target5)
    loss5 = jax.block_until_ready(dice_loss(pred5, target5, tile_s=512))
    assert abs(float(loss5) - float(ref5)) < 1e-5, (float(loss5), float(ref5))

    # 6) Native bf16 streaming (no f32 upcast in HBM; f32 accumulation in-kernel).
    pred_bf16 = pred.astype(jnp.bfloat16)
    target_bf16 = target.astype(jnp.bfloat16)
    ref_bf16 = reference(pred_bf16, target_bf16)
    loss_bf16 = jax.block_until_ready(dice_loss(pred_bf16, target_bf16))
    assert abs(float(loss_bf16) - float(ref_bf16)) < 2e-2, (float(loss_bf16), float(ref_bf16))

    print("KERNEL_OK")
</pallas_src>

<mosaic_0001>
module attributes {stable_mosaic.version = 11 : i64} {
  func.func @_dice_partial_kernel(%arg0: i32, %arg1: i32, %arg2: memref<8x128xf32, #tpu.memory_space<vmem>>, %arg3: memref<8x128xf32, #tpu.memory_space<vmem>>, %arg4: memref<1x8x128xf32, #tpu.memory_space<vmem>>, %arg5: memref<1x8x128xf32, #tpu.memory_space<vmem>>) attributes {dimension_semantics = [#tpu.dimension_semantics<parallel>, #tpu.dimension_semantics<arbitrary>], iteration_bounds = array<i64: 2, 1>, scalar_prefetch = 0 : i64, scratch_operands = 0 : i64, tpu.core_type = #tpu.core_type<tc>, window_params = [{transform_indices = @transform_0, window_bounds = array<i64: 8, 128>}, {transform_indices = @transform_1, window_bounds = array<i64: 8, 128>}, {transform_indices = @transform_2, window_bounds = array<i64: 1, 8, 128>}, {transform_indices = @transform_3, window_bounds = array<i64: 1, 8, 128>}]} {
    %c1_i32 = arith.constant 1 : i32
    %0 = arith.muli %arg0, %c1_i32 : i32
    %1 = arith.addi %0, %arg1 : i32
    %c0_i32 = arith.constant 0 : i32
    %2 = arith.cmpi eq, %arg1, %c0_i32 : i32
    %3 = arith.extui %2 : i1 to i32
    %c0_i32_0 = arith.constant 0 : i32
    %4 = arith.cmpi ne, %3, %c0_i32_0 : i32
    scf.if %4 {
      %cst = arith.constant 0.000000e+00 : f32
      %15 = vector.broadcast %cst : f32 to vector<1x8x128xf32>
      %c0_7 = arith.constant 0 : index
      %c0_8 = arith.constant 0 : index
      %c0_9 = arith.constant 0 : index
      %16 = vector.load %arg4[%c0_7, %c0_8, %c0_9] : memref<1x8x128xf32, #tpu.memory_space<vmem>>, vector<1x8x128xf32>
      tpu.vector_store %arg4[%c0_7, %c0_8, %c0_9], %15 {strides = array<i32>} : memref<1x8x128xf32, #tpu.memory_space<vmem>>, vector<1x8x128xf32>,
      %cst_10 = arith.constant 0.000000e+00 : f32
      %17 = vector.broadcast %cst_10 : f32 to vector<1x8x128xf32>
      %c0_11 = arith.constant 0 : index
      %c0_12 = arith.constant 0 : index
      %c0_13 = arith.constant 0 : index
      %18 = vector.load %arg5[%c0_11, %c0_12, %c0_13] : memref<1x8x128xf32, #tpu.memory_space<vmem>>, vector<1x8x128xf32>
      tpu.vector_store %arg5[%c0_11, %c0_12, %c0_13], %17 {strides = array<i32>} : memref<1x8x128xf32, #tpu.memory_space<vmem>>, vector<1x8x128xf32>,
    } else {
    }
    %c0 = arith.constant 0 : index
    %c0_1 = arith.constant 0 : index
    %5 = vector.load %arg2[%c0, %c0_1] : memref<8x128xf32, #tpu.memory_space<vmem>>, vector<8x128xf32>
    %c0_2 = arith.constant 0 : index
    %c0_3 = arith.constant 0 : index
    %6 = vector.load %arg3[%c0_2, %c0_3] : memref<8x128xf32, #tpu.memory_space<vmem>>, vector<8x128xf32>
    %c1_i32_4 = arith.constant 1 : i32
    %7 = arith.addi %1, %c1_i32_4 : i32
    %c128_i32 = arith.constant 128 : i32
    %8 = arith.muli %7, %c128_i32 : i32
    %c240_i32 = arith.constant 240 : i32
    %9 = arith.cmpi sle, %8, %c240_i32 : i32
    %10 = arith.extui %9 : i1 to i32
    %c0_i32_5 = arith.constant 0 : i32
    %11 = arith.cmpi ne, %10, %c0_i32_5 : i32
    scf.if %11 {
      %c0_7 = arith.constant 0 : index
      %c0_8 = arith.constant 0 : index
      %c0_9 = arith.constant 0 : index
      %15 = vector.load %arg4[%c0_7, %c0_8, %c0_9] : memref<1x8x128xf32, #tpu.memory_space<vmem>>, vector<1x8x128xf32>
      %16 = arith.mulf %5, %6 : vector<8x128xf32>
      %17 = vector.shape_cast %16 : vector<8x128xf32> to vector<1x8x128xf32>
      %18 = arith.addf %15, %17 : vector<1x8x128xf32>
      %c0_10 = arith.constant 0 : index
      %c0_11 = arith.constant 0 : index
      %c0_12 = arith.constant 0 : index
      %19 = vector.load %arg4[%c0_10, %c0_11, %c0_12] : memref<1x8x128xf32, #tpu.memory_space<vmem>>, vector<1x8x128xf32>
      tpu.vector_store %arg4[%c0_10, %c0_11, %c0_12], %18 {strides = array<i32>} : memref<1x8x128xf32, #tpu.memory_space<vmem>>, vector<1x8x128xf32>,
      %c0_13 = arith.constant 0 : index
      %c0_14 = arith.constant 0 : index
      %c0_15 = arith.constant 0 : index
      %20 = vector.load %arg5[%c0_13, %c0_14, %c0_15] : memref<1x8x128xf32, #tpu.memory_space<vmem>>, vector<1x8x128xf32>
      %21 = arith.mulf %5, %5 : vector<8x128xf32>
      %22 = arith.mulf %6, %6 : vector<8x128xf32>
      %23 = arith.addf %21, %22 : vector<8x128xf32>
      %24 = vector.shape_cast %23 : vector<8x128xf32> to vector<1x8x128xf32>
      %25 = arith.addf %20, %24 : vector<1x8x128xf32>
      %c0_16 = arith.constant 0 : index
      %c0_17 = arith.constant 0 : index
      %c0_18 = arith.constant 0 : index
      %26 = vector.load %arg5[%c0_16, %c0_17, %c0_18] : memref<1x8x128xf32, #tpu.memory_space<vmem>>, vector<1x8x128xf32>
      tpu.vector_store %arg5[%c0_16, %c0_17, %c0_18], %25 {strides = array<i32>} : memref<1x8x128xf32, #tpu.memory_space<vmem>>, vector<1x8x128xf32>,
    } else {
    }
    %true = arith.constant true
    %12 = arith.xori %9, %true : i1
    %13 = arith.extui %12 : i1 to i32
    %c0_i32_6 = arith.constant 0 : i32
    %14 = arith.cmpi ne, %13, %c0_i32_6 : i32
    scf.if %14 {
      %15 = tpu.iota {dimensions = array<i32: 1>} : vector<8x128xi32>
      %c128_i32_7 = arith.constant 128 : i32
      %16 = arith.muli %1, %c128_i32_7 : i32
      %17 = vector.broadcast %16 : i32 to vector<8x128xi32>
      %18 = arith.addi %17, %15 : vector<8x128xi32>
      %c240_i32_8 = arith.constant 240 : i32
      %19 = vector.broadcast %c240_i32_8 : i32 to vector<8x128xi32>
      %20 = arith.cmpi slt, %18, %19 : vector<8x128xi32>
      %cst = arith.constant 0.000000e+00 : f32
      %21 = vector.broadcast %cst : f32 to vector<8x128xf32>
      %22 = arith.select %20, %5, %21 : vector<8x128xi1>, vector<8x128xf32>
      %cst_9 = arith.constant 0.000000e+00 : f32
      %23 = vector.broadcast %cst_9 : f32 to vector<8x128xf32>
      %24 = arith.select %20, %6, %23 : vector<8x128xi1>, vector<8x128xf32>
      %c0_10 = arith.constant 0 : index
      %c0_11 = arith.constant 0 : index
      %c0_12 = arith.constant 0 : index
      %25 = vector.load %arg4[%c0_10, %c0_11, %c0_12] : memref<1x8x128xf32, #tpu.memory_space<vmem>>, vector<1x8x128xf32>
      %26 = arith.mulf %22, %24 : vector<8x128xf32>
      %27 = vector.shape_cast %26 : vector<8x128xf32> to vector<1x8x128xf32>
      %28 = arith.addf %25, %27 : vector<1x8x128xf32>
      %c0_13 = arith.constant 0 : index
      %c0_14 = arith.constant 0 : index
      %c0_15 = arith.constant 0 : index
      %29 = vector.load %arg4[%c0_13, %c0_14, %c0_15] : memref<1x8x128xf32, #tpu.memory_space<vmem>>, vector<1x8x128xf32>
      tpu.vector_store %arg4[%c0_13, %c0_14, %c0_15], %28 {strides = array<i32>} : memref<1x8x128xf32, #tpu.memory_space<vmem>>, vector<1x8x128xf32>,
      %c0_16 = arith.constant 0 : index
      %c0_17 = arith.constant 0 : index
      %c0_18 = arith.constant 0 : index
      %30 = vector.load %arg5[%c0_16, %c0_17, %c0_18] : memref<1x8x128xf32, #tpu.memory_space<vmem>>, vector<1x8x128xf32>
      %31 = arith.mulf %22, %22 : vector<8x128xf32>
      %32 = arith.mulf %24, %24 : vector<8x128xf32>
      %33 = arith.addf %31, %32 : vector<8x128xf32>
      %34 = vector.shape_cast %33 : vector<8x128xf32> to vector<1x8x128xf32>
      %35 = arith.addf %30, %34 : vector<1x8x128xf32>
      %c0_19 = arith.constant 0 : index
      %c0_20 = arith.constant 0 : index
      %c0_21 = arith.constant 0 : index
      %36 = vector.load %arg5[%c0_19, %c0_20, %c0_21] : memref<1x8x128xf32, #tpu.memory_space<vmem>>, vector<1x8x128xf32>
      tpu.vector_store %arg5[%c0_19, %c0_20, %c0_21], %35 {strides = array<i32>} : memref<1x8x128xf32, #tpu.memory_space<vmem>>, vector<1x8x128xf32>,
    } else {
    }
    return
  }
  func.func @transform_0(%arg0: i32, %arg1: i32) -> (i32, i32) {
    %c1_i32 = arith.constant 1 : i32
    %0 = arith.muli %arg0, %c1_i32 : i32
    %1 = arith.addi %0, %arg1 : i32
    %c1_i32_0 = arith.constant 1 : i32
    %2 = arith.minsi %1, %c1_i32_0 : i32
    %c0_i32 = arith.constant 0 : i32
    %c0_i32_1 = arith.constant 0 : i32
    return %c0_i32, %2 : i32, i32
  }
  func.func @transform_1(%arg0: i32, %arg1: i32) -> (i32, i32) {
    %c1_i32 = arith.constant 1 : i32
    %0 = arith.muli %arg0, %c1_i32 : i32
    %1 = arith.addi %0, %arg1 : i32
    %c1_i32_0 = arith.constant 1 : i32
    %2 = arith.minsi %1, %c1_i32_0 : i32
    %c0_i32 = arith.constant 0 : i32
    %c0_i32_1 = arith.constant 0 : i32
    return %c0_i32, %2 : i32, i32
  }
  func.func @transform_2(%arg0: i32, %arg1: i32) -> (i32, i32, i32) {
    %c0_i32 = arith.constant 0 : i32
    %c0_i32_0 = arith.constant 0 : i32
    %c0_i32_1 = arith.constant 0 : i32
    return %arg0, %c0_i32, %c0_i32_0 : i32, i32, i32
  }
  func.func @transform_3(%arg0: i32, %arg1: i32) -> (i32, i32, i32) {
    %c0_i32 = arith.constant 0 : i32
    %c0_i32_0 = arith.constant 0 : i32
    %c0_i32_1 = arith.constant 0 : i32
    return %arg0, %c0_i32, %c0_i32_0 : i32, i32, i32
  }
}

</mosaic_0001>

<llo_original>
// kernel: tpu_custom_call.1
$region0: #{tpu_custom_call.1}
  #allocation0 [shape = 'u32[]', space=smem, size = 0x4, offset = 0x4, fixed_abs, tag = 'smem constant byte address 0x4 - core index']
  #allocation1 [shape = 'u32[144,128]{1,0:T(1,128)}', space=vmem, size = 0x12000, scoped, tag = 'internal scratch']
  %s0 = inlined_call_operand.hbm [shape: f32[8,240], index: 0, kind: input, shape index: {}]
  %s1 = inlined_call_operand.hbm [shape: f32[8,240], index: 1, kind: input, shape index: {}]
  %s2 = inlined_call_operand.hbm [shape: f32[2,8,128], index: 2, kind: output, shape index: {0}]
  %s3 = inlined_call_operand.hbm [shape: f32[2,8,128], index: 3, kind: output, shape index: {1}]
  %4 = xla_tuple %s2, %s3
  %s5 = sld [smem:[#allocation0]]
  $region69: #{tpu_custom_call.1} parent=0
    _
  %s7 = ssub.s32 1, %s5
  %s8 = scalar_select 0, %s7, %s5
  $region1: #{tpu_custom_call.1} parent=0
    #allocation2 [shape = 'u8[8192]{0}', space=vmem, size = 0x2000, scoped, tag = 'input window, operand 0']
    #allocation3 [shape = 's32[2]{0}', space=sflag, size = 0x8, scoped, tag = 'scoped memory for tpu_custom_call.1']
    #allocation4 [shape = 's32[2]{0}', space=sflag, size = 0x8, scoped, tag = 'scoped memory for tpu_custom_call.1']
    #allocation5 [shape = 'u8[8192]{0}', space=vmem, size = 0x2000, scoped, tag = 'input window, operand 1']
    #allocation6 [shape = 's32[2]{0}', space=sflag, size = 0x8, scoped, tag = 'scoped memory for tpu_custom_call.1']
    #allocation7 [shape = 'u8[8192]{0}', space=vmem, size = 0x2000, scoped, tag = 'output window, operand 0']
    #allocation8 [shape = 'u8[8192]{0}', space=vmem, size = 0x2000, scoped, tag = 'output window, operand 1']
    #allocation9 [shape = 's32[2]{0}', space=sflag, size = 0x8, scoped, tag = 'scoped memory for tpu_custom_call.1']
    %9 = vsyncpa [#allocation3], 0
    %s10 = scalar_lea.sflag [#allocation3], 1
    %11 = vsyncpa %s10, 0
    %12 = vsyncpa [#allocation6], 0
    %s13 = scalar_lea.sflag [#allocation6], 1
    %14 = vsyncpa %s13, 0
    %15 = vsyncpa [#allocation4], 0
    %s16 = scalar_lea.sflag [#allocation4], 1
    %17 = vsyncpa %s16, 0
    %18 = vsyncpa [#allocation9], 0
    %s19 = scalar_lea.sflag [#allocation9], 1
    %20 = vsyncpa %s19, 0
    loop: start=0, step=1, limit=4
    $region2: #{tpu_custom_call.1} parent=1 // loop_pre_header
      _
    $region3: #{tpu_custom_call.1} parent=1 // loop_header
      %s22 = sphi 0, %s26
      %p23 = scmp.ge.s32.totalorder %s22, 4
      %s29 = sphi 0, %s41
      %s30 = sphi 0, %s37
      %s31 = sphi 0, %s29
      %s32 = sphi 0, %s30
      %s33 = sphi 0, %s31
      %s34 = sphi 0, %s32
      %s50 = sphi 0, %s52
      %s53 = sphi 0, %s50
      %s54 = sphi 0, %s53
      %s70 = sphi 0, %s54
      %s82 = sphi 0, %s84
      %s85 = sphi 0, %s82
      %s86 = sphi 0, %s85
      %s102 = sphi 0, %s86
      %s108 = sphi 0, %s110
      %s111 = sphi 0, %s108
      %s112 = sphi 0, %s111
      %s128 = sphi 0, %s112
      %s134 = sphi 0, %s136
      %s137 = sphi 0, %s134
      %s138 = sphi 0, %s137
      %s154 = sphi 0, %s138
    $region4: #{tpu_custom_call.1} parent=1 // loop_header_branch
      %25 = sbr.rel (%p23) target = $region8
    $region5: #{tpu_custom_call.1} parent=1 // loop_body
      %s27 = ssub.s32 %s22, 1
      %s28 = ssub.s32 %s22, 2
      %s35 = sadd.s32 1, %s30
      %p36 = scmp.ge.s32.totalorder %s35, 1
      %s37 = scalar_select %p36, 0, %s35
      %s38 = sadd.s32 1, %s29
      %s39 = scalar_select %p36, %s38, %s29
      %p40 = scmp.ge.s32.totalorder %s39, 2
      %s41 = scalar_select %p40, 0, %s39
      %s42 = sadd.s32 %s29, %s30
      %p43 = scmp.lt.s32.totalorder %s42, 1
      %s44 = scalar_select %p43, %s42, 1
      %s45 = sadd.s32 %s41, %s37
      %p46 = scmp.lt.s32.totalorder %s45, 1
      %s47 = scalar_select %p46, %s45, 1
      %s48 = ssub.s32 %s44, %s47
      %p49 = scmp.eq.s32.totalorder %s48, 0
      %s51 = sadd.s32 %s50, 1
      %s52 = scalar_select %p49, %s50, %s51
      %p55 = pneg %p49
      %p56 = scmp.eq.s32.totalorder %s22, 1
      %p57 = por %p55, %p56
      %p58 = scmp.ne.s32.totalorder %s50, %s53
      %p59 = scmp.eq.s32.totalorder %s22, 0
      %p60 = por %p58, %p59
      %p61 = scmp.ne.s32.totalorder %s50, %s53
      %p62 = scmp.eq.s32.totalorder %s27, 1
      %p63 = por %p61, %p62
      %p64 = scmp.ne.s32.totalorder %s53, %s54
      %p65 = scmp.eq.s32.totalorder %s27, 0
      %p66 = por %p64, %p65
      %p67 = scmp.ne.s32.totalorder %s53, %s54
      %p68 = scmp.eq.s32.totalorder %s28, 1
      %p69 = por %p67, %p68
      %p71 = scmp.ne.s32.totalorder %s54, %s70
      %p72 = scmp.eq.s32.totalorder %s28, 0
      %p73 = por %p71, %p72
      %s74 = sadd.s32 %s29, %s30
      %p75 = scmp.lt.s32.totalorder %s74, 1
      %s76 = scalar_select %p75, %s74, 1
      %s77 = sadd.s32 %s41, %s37
      %p78 = scmp.lt.s32.totalorder %s77, 1
      %s79 = scalar_select %p78, %s77, 1
      %s80 = ssub.s32 %s76, %s79
      %p81 = scmp.eq.s32.totalorder %s80, 0
      %s83 = sadd.s32 %s82, 1
      %s84 = scalar_select %p81, %s82, %s83
      %p87 = pneg %p81
      %p88 = scmp.eq.s32.totalorder %s22, 1
      %p89 = por %p87, %p88
      %p90 = scmp.ne.s32.totalorder %s82, %s85
      %p91 = scmp.eq.s32.totalorder %s22, 0
      %p92 = por %p90, %p91
      %p93 = scmp.ne.s32.totalorder %s82, %s85
      %p94 = scmp.eq.s32.totalorder %s27, 1
      %p95 = por %p93, %p94
      %p96 = scmp.ne.s32.totalorder %s85, %s86
      %p97 = scmp.eq.s32.totalorder %s27, 0
      %p98 = por %p96, %p97
      %p99 = scmp.ne.s32.totalorder %s85, %s86
      %p100 = scmp.eq.s32.totalorder %s28, 1
      %p101 = por %p99, %p100
      %p103 = scmp.ne.s32.totalorder %s86, %s102
      %p104 = scmp.eq.s32.totalorder %s28, 0
      %p105 = por %p103, %p104
      %s106 = ssub.s32 %s29, %s41
      %p107 = scmp.eq.s32.totalorder %s106, 0
      %s109 = sadd.s32 %s108, 1
      %s110 = scalar_select %p107, %s108, %s109
      %p113 = pneg %p107
      %p114 = scmp.eq.s32.totalorder %s22, 1
      %p115 = por %p113, %p114
      %p116 = scmp.ne.s32.totalorder %s108, %s111
      %p117 = scmp.eq.s32.totalorder %s22, 0
      %p118 = por %p116, %p117
      %p119 = scmp.ne.s32.totalorder %s108, %s111
      %p120 = scmp.eq.s32.totalorder %s27, 1
      %p121 = por %p119, %p120
      %p122 = scmp.ne.s32.totalorder %s111, %s112
      %p123 = scmp.eq.s32.totalorder %s27, 0
      %p124 = por %p122, %p123
      %p125 = scmp.ne.s32.totalorder %s111, %s112
      %p126 = scmp.eq.s32.totalorder %s28, 1
      %p127 = por %p125, %p126
      %p129 = scmp.ne.s32.totalorder %s112, %s128
      %p130 = scmp.eq.s32.totalorder %s28, 0
      %p131 = por %p129, %p130
      %s132 = ssub.s32 %s29, %s41
      %p133 = scmp.eq.s32.totalorder %s132, 0
      %s135 = sadd.s32 %s134, 1
      %s136 = scalar_select %p133, %s134, %s135
      %p139 = pneg %p133
      %p140 = scmp.eq.s32.totalorder %s22, 1
      %p141 = por %p139, %p140
      %p142 = scmp.ne.s32.totalorder %s134, %s137
      %p143 = scmp.eq.s32.totalorder %s22, 0
      %p144 = por %p142, %p143
      %p145 = scmp.ne.s32.totalorder %s134, %s137
      %p146 = scmp.eq.s32.totalorder %s27, 1
      %p147 = por %p145, %p146
      %p148 = scmp.ne.s32.totalorder %s137, %s138
      %p149 = scmp.eq.s32.totalorder %s27, 0
      %p150 = por %p148, %p149
      %p151 = scmp.ne.s32.totalorder %s137, %s138
      %p152 = scmp.eq.s32.totalorder %s28, 1
      %p153 = por %p151, %p152
      %p155 = scmp.ne.s32.totalorder %s138, %s154
      %p156 = scmp.eq.s32.totalorder %s28, 0
      %p157 = por %p155, %p156
      %p158 = scmp.le.s32.totalorder 1, %s22
      %p159 = scmp.lt.s32.totalorder %s22, 3
      %p160 = pnand %p158, %p159
      %p161 = pneg %p160
      // Predicated region
      $region9: #{tpu_custom_call.1} parent=5 // pred_check
        _
      $region10: #{tpu_custom_call.1} parent=5 // pred_check_branch
        %163 = sbr.rel (%p160) target = $region12
      $region11: #{tpu_custom_call.1} parent=5 // pred_region
        %s164 = ssub.s32 %s22, 1
      $region12: #{tpu_custom_call.1} parent=5 // pred_fallthru
        _
      %p165 = scmp.lt.s32.totalorder %s22, 2
      // Predicated region
      $region13: #{tpu_custom_call.1} parent=5 // pred_check
        %p166 = pneg %p165
      $region14: #{tpu_custom_call.1} parent=5 // pred_check_branch
        %168 = sbr.rel (%p166) target = $region16
      $region15: #{tpu_custom_call.1} parent=5 // pred_region
        // Predicated region
        $region17: #{tpu_custom_call.1} parent=15 // pred_check
          %p169 = pneg %p60
        $region18: #{tpu_custom_call.1} parent=15 // pred_check_branch
          %171 = sbr.rel (%p169) target = $region20
        $region19: #{tpu_custom_call.1} parent=15 // pred_region
          %s172 = sand.u32 %s50, 1
          %s173 = scalar_lea.sflag [#allocation3], %s172
          %s174 = sand.u32 %s50, 1
          %s175 = smul.addr %s174, 8
          %s176 = scalar_lea.vmem [#allocation2], %s175
          %s177 = sadd.s32 %s29, %s30
          %p178 = scmp.lt.s32.totalorder %s177, 1
          %s179 = scalar_select %p178, %s177, 1
          %s181 = ssub.s32 128, 128
          %182 = vsyncadd %s173, %s181
          %s183 = smul.addr %s179, 128
          %s184 = scalar_lea.hbm %s0, %s183
          %s186 = sshll.u32 %s176, 4
          %s187 = int_to_ptr.vmem [resolvable:$true] %s186
          %189 = dma.hbm_to_vmem [thread:$0]  %s184, 128, %s187, %s173
        $region20: #{tpu_custom_call.1} parent=15 // pred_fallthru
          _
        // Predicated region
        $region21: #{tpu_custom_call.1} parent=15 // pred_check
          %p190 = pneg %p92
        $region22: #{tpu_custom_call.1} parent=15 // pred_check_branch
          %192 = sbr.rel (%p190) target = $region24
        $region23: #{tpu_custom_call.1} parent=15 // pred_region
          %s193 = sand.u32 %s82, 1
          %s194 = scalar_lea.sflag [#allocation6], %s193
          %s195 = sand.u32 %s82, 1
          %s196 = smul.addr %s195, 8
          %s197 = scalar_lea.vmem [#allocation5], %s196
          %s198 = sadd.s32 %s29, %s30
          %p199 = scmp.lt.s32.totalorder %s198, 1
          %s200 = scalar_select %p199, %s198, 1
          %s202 = ssub.s32 128, 128
          %203 = vsyncadd %s194, %s202
          %s204 = smul.addr %s200, 128
          %s205 = scalar_lea.hbm %s1, %s204
          %s207 = sshll.u32 %s197, 4
          %s208 = int_to_ptr.vmem [resolvable:$true] %s207
          %210 = dma.hbm_to_vmem [thread:$0]  %s205, 128, %s208, %s194
        $region24: #{tpu_custom_call.1} parent=15 // pred_fallthru
          _
      $region16: #{tpu_custom_call.1} parent=5 // pred_fallthru
        _
      %p211 = scmp.le.s32.totalorder 1, %s22
      %p212 = scmp.lt.s32.totalorder %s22, 3
      %p213 = pnand %p211, %p212
      %p214 = pneg %p213
      // Predicated region
      $region25: #{tpu_custom_call.1} parent=5 // pred_check
        _
      $region26: #{tpu_custom_call.1} parent=5 // pred_check_branch
        %216 = sbr.rel (%p213) target = $region28
      $region27: #{tpu_custom_call.1} parent=5 // pred_region
        %s217 = ssub.s32 %s22, 1
        %s218 = sand.u32 %s53, 1
        %s219 = scalar_lea.sflag [#allocation3], %s218
        %s220 = sand.u32 %s53, 1
        %s221 = smul.addr %s220, 8
        %s222 = scalar_lea.vmem [#allocation2], %s221
        // Predicated region
        $region29: #{tpu_custom_call.1} parent=27 // pred_check
          %p223 = pneg %p66
        $region30: #{tpu_custom_call.1} parent=27 // pred_check_branch
          %225 = sbr.rel (%p223) target = $region32
        $region31: #{tpu_custom_call.1} parent=27 // pred_region
          %226 = dma.done %s219, 128
        $region32: #{tpu_custom_call.1} parent=27 // pred_fallthru
          _
        %s227 = sand.u32 %s85, 1
        %s228 = scalar_lea.sflag [#allocation6], %s227
        %s229 = sand.u32 %s85, 1
        %s230 = smul.addr %s229, 8
        %s231 = scalar_lea.vmem [#allocation5], %s230
        // Predicated region
        $region33: #{tpu_custom_call.1} parent=27 // pred_check
          %p232 = pneg %p98
        $region34: #{tpu_custom_call.1} parent=27 // pred_check_branch
          %234 = sbr.rel (%p232) target = $region36
        $region35: #{tpu_custom_call.1} parent=27 // pred_region
          %235 = dma.done %s228, 128
        $region36: #{tpu_custom_call.1} parent=27 // pred_fallthru
          _
        %s236 = sand.u32 %s53, 1
        %s237 = scalar_lea.sflag [#allocation3], %s236
        %s238 = sand.u32 %s53, 1
        %s239 = smul.addr %s238, 8
        %s240 = scalar_lea.vmem [#allocation2], %s239
        %p241 = pneg %p66
        %p242 = pneg %p63
        %s243 = sand.u32 %s85, 1
        %s244 = scalar_lea.sflag [#allocation6], %s243
        %s245 = sand.u32 %s85, 1
        %s246 = smul.addr %s245, 8
        %s247 = scalar_lea.vmem [#allocation5], %s246
        %p248 = pneg %p98
        %p249 = pneg %p95
        %p250 = pneg %p124
        %p251 = pneg %p121
        %s252 = sand.u32 %s111, 1
        %s253 = scalar_lea.sflag [#allocation4], %s252
        %s254 = sand.u32 %s111, 1
        %s255 = smul.addr %s254, 8
        %s256 = scalar_lea.vmem [#allocation7], %s255
        %p257 = pneg %p150
        %p258 = pneg %p147
        %s259 = sand.u32 %s137, 1
        %s260 = scalar_lea.sflag [#allocation9], %s259
        %s261 = sand.u32 %s137, 1
        %s262 = smul.addr %s261, 8
        %s263 = scalar_lea.vmem [#allocation8], %s262
        %s264 = sadd.s32 %s31, %s32
        %p265 = scmp.lt.s32.totalorder %s264, 1
        %s266 = scalar_select %p265, %s264, 1
        %s267 = sadd.s32 %s31, %s32
        %p268 = scmp.lt.s32.totalorder %s267, 1
        %s269 = scalar_select %p268, %s267, 1
        %s270 = sadd.s32 %s31, %s32
        %p271 = scmp.eq.s32.totalorder %s32, 0
        // Predicated region
        $region37: #{tpu_custom_call.1} parent=27 // pred_check
          %p272 = pneg %p271
        $region38: #{tpu_custom_call.1} parent=27 // pred_check_branch
          %274 = sbr.rel (%p272) target = $region40
        $region39: #{tpu_custom_call.1} parent=27 // pred_region
          %275 = vst [vmem:[%s256] sm:$0xff] 0.0
          %276 = vst [vmem:[%s263] sm:$0xff] 0.0
        $region40: #{tpu_custom_call.1} parent=27 // pred_fallthru
          _
        %v277 = vld [vmem:[%s222] sm:$0xff]
        %v278 = vld [vmem:[%s231] sm:$0xff]
        %s279 = sadd.s32 %s270, 1
        %s280 = smul.u32 %s279, 128
        %p281 = scmp.le.s32.totalorder %s280, 240
        // Predicated region
        $region41: #{tpu_custom_call.1} parent=27 // pred_check
          %p282 = pneg %p281
        $region42: #{tpu_custom_call.1} parent=27 // pred_check_branch
          %284 = sbr.rel (%p282) target = $region44
        $region43: #{tpu_custom_call.1} parent=27 // pred_region
          %v285 = vld [vmem:[%s256] sm:$0xff]
          %v286 = vmul.f32 %v277, %v278
          %v287 = vadd.f32 %v285, %v286
          %288 = vst [vmem:[%s256] sm:$0xff] %v287
          %v289 = vld [vmem:[%s263] sm:$0xff]
          %v290 = vmul.f32 %v277, %v277
          %v291 = vmul.f32 %v278, %v278
          %v292 = vadd.f32 %v290, %v291
          %v293 = vadd.f32 %v289, %v292
          %294 = vst [vmem:[%s263] sm:$0xff] %v293
        $region44: #{tpu_custom_call.1} parent=27 // pred_fallthru
          _
        %p295 = scmp.gt.s32.totalorder %s280, 240
        // Predicated region
        $region45: #{tpu_custom_call.1} parent=27 // pred_check
          %p296 = pneg %p295
        $region46: #{tpu_custom_call.1} parent=27 // pred_check_branch
          %298 = sbr.rel (%p296) target = $region48
        $region47: #{tpu_custom_call.1} parent=27 // pred_region
          %v299 = vlaneseq
          %v300 = vand.u32 %v299, 127
          %s301 = smul.u32 %s270, 128
          %v302 = vstv %s301
          %v303 = vadd.s32 %v302, %v300
          %vm304 = vcmp.lt.s32.totalorder %v303, 240
          %v305 = vsel %vm304, %v277, 0.0
          %v306 = vsel %vm304, %v278, 0.0
          %v307 = vld [vmem:[%s256] sm:$0xff]
          %v308 = vmul.f32 %v305, %v306
          %v309 = vadd.f32 %v307, %v308
          %310 = vst [vmem:[%s256] sm:$0xff] %v309
          %v311 = vld [vmem:[%s263] sm:$0xff]
          %v312 = vmul.f32 %v305, %v305
          %v313 = vmul.f32 %v306, %v306
          %v314 = vadd.f32 %v312, %v313
          %v315 = vadd.f32 %v311, %v314
          %316 = vst [vmem:[%s263] sm:$0xff] %v315
        $region48: #{tpu_custom_call.1} parent=27 // pred_fallthru
          _
        %s317 = sand.u32 %s111, 1
        %s318 = scalar_lea.sflag [#allocation4], %s317
        %s319 = sand.u32 %s111, 1
        %s320 = smul.addr %s319, 8
        %s321 = scalar_lea.vmem [#allocation7], %s320
        %s322 = sand.u32 %s137, 1
        %s323 = scalar_lea.sflag [#allocation9], %s322
        %s324 = sand.u32 %s137, 1
        %s325 = smul.addr %s324, 8
        %s326 = scalar_lea.vmem [#allocation8], %s325
        // Predicated region
        $region49: #{tpu_custom_call.1} parent=27 // pred_check
          %p327 = pneg %p121
        $region50: #{tpu_custom_call.1} parent=27 // pred_check_branch
          %329 = sbr.rel (%p327) target = $region52
        $region51: #{tpu_custom_call.1} parent=27 // pred_region
          %s331 = ssub.s32 128, 128
          %332 = vsyncadd %s318, %s331
          %s333 = smul.addr %s31, 128
          %s334 = scalar_lea.hbm %s2, %s333
          %s336 = sshll.u32 %s321, 4
          %s337 = int_to_ptr.vmem [resolvable:$true] %s336
          %339 = dma.vmem_to_hbm [thread:$0]  %s337, 128, %s334, %s318
        $region52: #{tpu_custom_call.1} parent=27 // pred_fallthru
          _
        // Predicated region
        $region53: #{tpu_custom_call.1} parent=27 // pred_check
          %p340 = pneg %p147
        $region54: #{tpu_custom_call.1} parent=27 // pred_check_branch
          %342 = sbr.rel (%p340) target = $region56
        $region55: #{tpu_custom_call.1} parent=27 // pred_region
          %s344 = ssub.s32 128, 128
          %345 = vsyncadd %s323, %s344
          %s346 = smul.addr %s31, 128
          %s347 = scalar_lea.hbm %s3, %s346
          %s349 = sshll.u32 %s326, 4
          %s350 = int_to_ptr.vmem [resolvable:$true] %s349
          %352 = dma.vmem_to_hbm [thread:$0]  %s350, 128, %s347, %s323
        $region56: #{tpu_custom_call.1} parent=27 // pred_fallthru
          _
      $region28: #{tpu_custom_call.1} parent=5 // pred_fallthru
        _
      %p353 = scmp.le.s32.totalorder 2, %s22
      // Predicated region
      $region57: #{tpu_custom_call.1} parent=5 // pred_check
        %p354 = pneg %p353
      $region58: #{tpu_custom_call.1} parent=5 // pred_check_branch
        %356 = sbr.rel (%p354) target = $region60
      $region59: #{tpu_custom_call.1} parent=5 // pred_region
        %s357 = ssub.s32 %s22, 2
        // Predicated region
        $region61: #{tpu_custom_call.1} parent=59 // pred_check
          %p358 = pneg %p127
        $region62: #{tpu_custom_call.1} parent=59 // pred_check_branch
          %360 = sbr.rel (%p358) target = $region64
        $region63: #{tpu_custom_call.1} parent=59 // pred_region
          %s361 = sand.u32 %s112, 1
          %s362 = scalar_lea.sflag [#allocation4], %s361
          %s363 = sand.u32 %s112, 1
          %s364 = smul.addr %s363, 8
          %s365 = scalar_lea.vmem [#allocation7], %s364
          %366 = dma.done %s362, 128
        $region64: #{tpu_custom_call.1} parent=59 // pred_fallthru
          _
        // Predicated region
        $region65: #{tpu_custom_call.1} parent=59 // pred_check
          %p367 = pneg %p153
        $region66: #{tpu_custom_call.1} parent=59 // pred_check_branch
          %369 = sbr.rel (%p367) target = $region68
        $region67: #{tpu_custom_call.1} parent=59 // pred_region
          %s370 = sand.u32 %s138, 1
          %s371 = scalar_lea.sflag [#allocation9], %s370
          %s372 = sand.u32 %s138, 1
          %s373 = smul.addr %s372, 8
          %s374 = scalar_lea.vmem [#allocation8], %s373
          %375 = dma.done %s371, 128
        $region68: #{tpu_custom_call.1} parent=59 // pred_fallthru
          _
      $region60: #{tpu_custom_call.1} parent=5 // pred_fallthru
        _
    $region6: #{tpu_custom_call.1} parent=1 // loop_footer
      %s26 = sadd.s32 1, %s22
    $region7: #{tpu_custom_call.1} parent=1 // loop_footer_branch
      %21 = sbr.rel target = $region3
    $region8: #{tpu_custom_call.1} parent=1 // loop_exit
      _
    %376 = vsyncpa [#allocation3], 1
    %s377 = scalar_lea.sflag [#allocation3], 1
    %378 = vsyncpa %s377, 1
    %379 = vsyncpa [#allocation6], 1
    %s380 = scalar_lea.sflag [#allocation6], 1
    %381 = vsyncpa %s380, 1
    %382 = vsyncpa [#allocation4], 1
    %s383 = scalar_lea.sflag [#allocation4], 1
    %384 = vsyncpa %s383, 1
    %385 = vsyncpa [#allocation9], 1
    %s386 = scalar_lea.sflag [#allocation9], 1
    %387 = vsyncpa %s386, 1

</llo_original>
